<compile_context>
chip_gen: v5e
topology: v5e:2x2
jax: 0.10.0
libtpu: 0.0.40
codegen_flags: <defaults>
</compile_context>

<pallas_src>
import jax
import jax.numpy as jnp
from jax.experimental import pallas as pl
from jax.experimental.pallas import tpu as pltpu

IN_DIM = 8 * 3   # 24
H1 = 50
H2 = 50
H3 = 40
OUT_DIM = 20

_LANE = 128  # lane width used for VMEM-footprint estimates


def _mlp_kernel(x_ref,
                w1_ref, b1_ref,
                w2_ref, b2_ref,
                w3_ref, b3_ref,
                w4_ref, b4_ref,
                o_ref):
    # Entire MLP fused: 4 MXU matmuls (operands in the weight dtype, f32
    # accumulation) + VPU bias/ReLU epilogue in f32.  The activation casts
    # are VPU work hidden under the MXU.
    h = jnp.dot(x_ref[...].astype(w1_ref.dtype), w1_ref[...],
                preferred_element_type=jnp.float32)
    h = jnp.maximum(h + b1_ref[...], 0.0)

    h = jnp.dot(h.astype(w2_ref.dtype), w2_ref[...],
                preferred_element_type=jnp.float32)
    h = jnp.maximum(h + b2_ref[...], 0.0)

    h = jnp.dot(h.astype(w3_ref.dtype), w3_ref[...],
                preferred_element_type=jnp.float32)
    h = jnp.maximum(h + b3_ref[...], 0.0)

    out = jnp.dot(h.astype(w4_ref.dtype), w4_ref[...],
                  preferred_element_type=jnp.float32)
    o_ref[...] = (out + b4_ref[...]).astype(o_ref.dtype)


def _round_up(x, m):
    return ((x + m - 1) // m) * m


def _chip_info():
    """Best-effort chip detection; conservative fall-backs if it fails."""
    num_cores = 1                 # TensorCores per chip sharing the grid
    scoped_default = 32 << 20     # default scoped-VMEM limit (v6e/v7x)
    physical = 128 << 20          # physical VMEM per TC (v5e/v6e)
    kind = ""
    try:
        kind = jax.devices()[0].device_kind.lower()
    except Exception:
        pass
    if ("v5 lite" in kind) or ("v5e" in kind) or ("v5litepod" in kind):
        scoped_default = 16 << 20
    if "v7" in kind:
        physical = 64 << 20
        num_cores = 2
    return num_cores, scoped_default, physical


def _choose_batch_tile(b, target, num_cores):
    """Single-TC chips (v5e/v6e): one big step up to `target` (a multi-step
    grid is a serial loop there -- pure per-step overhead).  Multi-TC chips
    (v7x): aim for an even number of steps so both cores get equal work, but
    don't split tiny batches."""
    if b <= 0:
        return 1
    if num_cores <= 1 or b <= 16:
        return min(b, target)
    if b <= 2 * target:
        return max(8, (b // 2) // 8 * 8)   # ~2 equal steps
    return target


def _maybe_vmem_limit(batch_tile, scoped_default, physical):
    # Lane-padded (128) double-buffered input/output blocks + ~3 live f32
    # intermediates + resident weights + slack for Mosaic internal scratch.
    est = batch_tile * _LANE * 4 * 8 + (512 << 10)
    if est <= int(0.6 * scoped_default):
        return None
    cap = max(scoped_default, physical - (24 << 20))
    return int(min(cap, 2 * est))


def _pallas_mlp(x, weights, *, batch_tile, grid_steps, out_dtype,
                vmem_limit_bytes):
    """One pallas_call covering rows [0, batch_tile*grid_steps) of x."""
    w1, b1, w2, b2, w3, b3, w4, b4 = weights
    out_rows = batch_tile * grid_steps

    # Weights/biases: constant block index -> fetched once, resident in VMEM
    # across the whole grid (total well under 30 KiB).
    def full(shape):
        return pl.BlockSpec(shape, lambda i: (0, 0))

    compiler_kwargs = dict(dimension_semantics=("parallel",))
    if vmem_limit_bytes is not None:
        compiler_kwargs["vmem_limit_bytes"] = vmem_limit_bytes

    w_elems = IN_DIM * H1 + H1 * H2 + H2 * H3 + H3 * OUT_DIM
    cost = pl.CostEstimate(
        flops=2 * out_rows * w_elems,
        transcendentals=0,
        bytes_accessed=(out_rows * IN_DIM * x.dtype.itemsize
                        + out_rows * OUT_DIM * jnp.dtype(out_dtype).itemsize
                        + w_elems * w1.dtype.itemsize
                        + (H1 + H2 + H3 + OUT_DIM) * 4),
    )

    return pl.pallas_call(
        _mlp_kernel,
        out_shape=jax.ShapeDtypeStruct((out_rows, OUT_DIM), out_dtype),
        grid=(grid_steps,),
        in_specs=[
            pl.BlockSpec((batch_tile, IN_DIM), lambda i: (i, 0)),
            full(w1.shape), full(b1.shape),
            full(w2.shape), full(b2.shape),
            full(w3.shape), full(b3.shape),
            full(w4.shape), full(b4.shape),
        ],
        out_specs=pl.BlockSpec((batch_tile, OUT_DIM), lambda i: (i, 0)),
        compiler_params=pltpu.CompilerParams(**compiler_kwargs),
        cost_estimate=cost,
    )(x, w1, b1, w2, b2, w3, b3, w4, b4)


def dlcm_hex_8_4_forward(x, params, *, operand_dtype=jnp.bfloat16,
                         out_dtype=jnp.float32,
                         batch_tile=None, batch_tile_target=4096):
    """x: (B, 24). Returns (B, 20) in out_dtype (default float32).

    operand_dtype: dtype of the matmul operands (default bfloat16 -- fewer
    MXU passes / less DMA).  Accumulation and epilogue stay f32.  Pass None
    to keep full-f32 operands (bit-accurate vs. the f32 reference).
    """
    (w1, b1), (w2, b2), (w3, b3), (w4, b4) = params
    B = x.shape[0]
    assert x.shape[1] == IN_DIM

    if operand_dtype is not None:
        # Only the tiny weights are cast in the wrapper; activations are cast
        # inside the kernel (no extra HBM round-trip of x).
        w1, w2, w3, w4 = (w.astype(operand_dtype) for w in (w1, w2, w3, w4))
    weights = (w1, b1, w2, b2, w3, b3, w4, b4)

    num_cores, scoped_default, physical = _chip_info()
    if batch_tile is None:
        batch_tile = _choose_batch_tile(B, batch_tile_target, num_cores)
    batch_tile = max(1, min(batch_tile, B))

    vmem_limit = _maybe_vmem_limit(batch_tile, scoped_default, physical)

    if batch_tile >= B:
        # Single step, full-array block: any batch size works, no padding.
        return _pallas_mlp(x, weights, batch_tile=B, grid_steps=1,
                           out_dtype=out_dtype, vmem_limit_bytes=vmem_limit)

    # Tiled main call over the tile-divisible prefix (the BlockSpec indexes
    # into the full x -- no prefix copy), then a tiny full-block tail call.
    batch_tile = max(8, (batch_tile // 8) * 8)   # tiled blocks need 8-aligned sublanes
    steps = B // batch_tile
    main = steps * batch_tile
    out_main = _pallas_mlp(x, weights, batch_tile=batch_tile, grid_steps=steps,
                           out_dtype=out_dtype, vmem_limit_bytes=vmem_limit)
    tail = B - main
    if tail == 0:
        return out_main
    out_tail = _pallas_mlp(x[main:], weights, batch_tile=tail, grid_steps=1,
                           out_dtype=out_dtype, vmem_limit_bytes=vmem_limit)
    return jnp.concatenate([out_main, out_tail], axis=0)


def init_params(key):
    """Deterministic init mimicking nn.Linear's uniform(-1/sqrt(fan_in), +)."""
    dims = [(IN_DIM, H1), (H1, H2), (H2, H3), (H3, OUT_DIM)]
    params = []
    for li, (fan_in, fan_out) in enumerate(dims):
        kw, kb = jax.random.split(jax.random.fold_in(key, li))
        bound = 1.0 / jnp.sqrt(fan_in)
        # stored as (in, out) so the forward pass is x @ W + b
        w = jax.random.uniform(kw, (fan_in, fan_out), jnp.float32, -bound, bound)
        b = jax.random.uniform(kb, (1, fan_out), jnp.float32, -bound, bound)
        params.append((w, b))
    return params


def reference_forward(x, params):
    h = x
    for li, (w, b) in enumerate(params):
        h = h @ w + b
        if li < len(params) - 1:
            h = jnp.maximum(h, 0.0)
    return h


if __name__ == "__main__":
    key = jax.random.PRNGKey(0)
    params = init_params(jax.random.fold_in(key, 1))

    # Small shapes consistent with the module.  batch=5 exercises the
    # non-multiple-of-8 full-array-block path; batch=8/20 the aligned paths.
    for batch in (5, 8, 20):
        x = jax.random.normal(jax.random.fold_in(key, 100 + batch),
                              (batch, IN_DIM), jnp.float32)
        ref = reference_forward(x, params)

        # Full-f32 operand path: must match the reference tightly.
        out_f32 = jax.block_until_ready(
            dlcm_hex_8_4_forward(x, params, operand_dtype=None))
        assert out_f32.shape == (batch, OUT_DIM)
        assert jnp.allclose(out_f32, ref, atol=1e-5, rtol=1e-5), \
            "f32 path mismatch vs reference"

        # Default bf16-operand path: f32 accumulation, looser tolerance.
        out_bf16 = jax.block_until_ready(dlcm_hex_8_4_forward(x, params))
        assert out_bf16.shape == (batch, OUT_DIM)
        assert out_bf16.dtype == jnp.float32
        assert jnp.allclose(out_bf16, ref, atol=5e-2, rtol=5e-2), \
            "bf16 path mismatch vs reference"

    print("KERNEL_OK")
</pallas_src>

<mosaic_0001>
module attributes {stable_mosaic.version = 11 : i64} {
  func.func @_mlp_kernel(%arg0: i32, %arg1: memref<5x24xf32, #tpu.memory_space<vmem>>, %arg2: memref<24x50xf32, #tpu.memory_space<vmem>>, %arg3: memref<1x50xf32, #tpu.memory_space<vmem>>, %arg4: memref<50x50xf32, #tpu.memory_space<vmem>>, %arg5: memref<1x50xf32, #tpu.memory_space<vmem>>, %arg6: memref<50x40xf32, #tpu.memory_space<vmem>>, %arg7: memref<1x40xf32, #tpu.memory_space<vmem>>, %arg8: memref<40x20xf32, #tpu.memory_space<vmem>>, %arg9: memref<1x20xf32, #tpu.memory_space<vmem>>, %arg10: memref<5x20xf32, #tpu.memory_space<vmem>>) attributes {dimension_semantics = [#tpu.dimension_semantics<parallel>], iteration_bounds = array<i64: 1>, scalar_prefetch = 0 : i64, scratch_operands = 0 : i64, tpu.core_type = #tpu.core_type<tc>, window_params = [{transform_indices = @transform_0, window_bounds = array<i64: 5, 24>}, {pipeline_mode = #tpu.pipeline_mode<synchronous>, transform_indices = @transform_1, window_bounds = array<i64: 24, 50>}, {pipeline_mode = #tpu.pipeline_mode<synchronous>, transform_indices = @transform_2, window_bounds = array<i64: 1, 50>}, {pipeline_mode = #tpu.pipeline_mode<synchronous>, transform_indices = @transform_3, window_bounds = array<i64: 50, 50>}, {pipeline_mode = #tpu.pipeline_mode<synchronous>, transform_indices = @transform_4, window_bounds = array<i64: 1, 50>}, {pipeline_mode = #tpu.pipeline_mode<synchronous>, transform_indices = @transform_5, window_bounds = array<i64: 50, 40>}, {pipeline_mode = #tpu.pipeline_mode<synchronous>, transform_indices = @transform_6, window_bounds = array<i64: 1, 40>}, {pipeline_mode = #tpu.pipeline_mode<synchronous>, transform_indices = @transform_7, window_bounds = array<i64: 40, 20>}, {pipeline_mode = #tpu.pipeline_mode<synchronous>, transform_indices = @transform_8, window_bounds = array<i64: 1, 20>}, {transform_indices = @transform_9, window_bounds = array<i64: 5, 20>}]} {
    %c0 = arith.constant 0 : index
    %c0_0 = arith.constant 0 : index
    %0 = vector.load %arg1[%c0, %c0_0] : memref<5x24xf32, #tpu.memory_space<vmem>>, vector<5x24xf32>
    %c0_1 = arith.constant 0 : index
    %c0_2 = arith.constant 0 : index
    %1 = vector.load %arg2[%c0_1, %c0_2] : memref<24x50xf32, #tpu.memory_space<vmem>>, vector<24x50xf32>
    %cst = arith.constant dense<0.000000e+00> : vector<5x50xf32>
    %2 = tpu.matmul %0, %1, %cst {dimension_numbers = #tpu.dot_dimension_numbers<[1], [0], [0], [1], [0, 0, 1, 1], [], []>} : vector<5x24xf32>, vector<24x50xf32>, vector<5x50xf32> -> vector<5x50xf32>
    %c0_3 = arith.constant 0 : index
    %c0_4 = arith.constant 0 : index
    %3 = vector.load %arg3[%c0_3, %c0_4] : memref<1x50xf32, #tpu.memory_space<vmem>>, vector<1x50xf32>
    %4 = vector.broadcast %3 : vector<1x50xf32> to vector<5x50xf32>
    %5 = arith.addf %2, %4 : vector<5x50xf32>
    %cst_5 = arith.constant 0.000000e+00 : f32
    %6 = vector.broadcast %cst_5 : f32 to vector<5x50xf32>
    %7 = arith.maximumf %5, %6 : vector<5x50xf32>
    %c0_6 = arith.constant 0 : index
    %c0_7 = arith.constant 0 : index
    %8 = vector.load %arg4[%c0_6, %c0_7] : memref<50x50xf32, #tpu.memory_space<vmem>>, vector<50x50xf32>
    %cst_8 = arith.constant dense<0.000000e+00> : vector<5x50xf32>
    %9 = tpu.matmul %7, %8, %cst_8 {dimension_numbers = #tpu.dot_dimension_numbers<[1], [0], [0], [1], [0, 0, 1, 1], [], []>} : vector<5x50xf32>, vector<50x50xf32>, vector<5x50xf32> -> vector<5x50xf32>
    %c0_9 = arith.constant 0 : index
    %c0_10 = arith.constant 0 : index
    %10 = vector.load %arg5[%c0_9, %c0_10] : memref<1x50xf32, #tpu.memory_space<vmem>>, vector<1x50xf32>
    %11 = vector.broadcast %10 : vector<1x50xf32> to vector<5x50xf32>
    %12 = arith.addf %9, %11 : vector<5x50xf32>
    %cst_11 = arith.constant 0.000000e+00 : f32
    %13 = vector.broadcast %cst_11 : f32 to vector<5x50xf32>
    %14 = arith.maximumf %12, %13 : vector<5x50xf32>
    %c0_12 = arith.constant 0 : index
    %c0_13 = arith.constant 0 : index
    %15 = vector.load %arg6[%c0_12, %c0_13] : memref<50x40xf32, #tpu.memory_space<vmem>>, vector<50x40xf32>
    %cst_14 = arith.constant dense<0.000000e+00> : vector<5x40xf32>
    %16 = tpu.matmul %14, %15, %cst_14 {dimension_numbers = #tpu.dot_dimension_numbers<[1], [0], [0], [1], [0, 0, 1, 1], [], []>} : vector<5x50xf32>, vector<50x40xf32>, vector<5x40xf32> -> vector<5x40xf32>
    %c0_15 = arith.constant 0 : index
    %c0_16 = arith.constant 0 : index
    %17 = vector.load %arg7[%c0_15, %c0_16] : memref<1x40xf32, #tpu.memory_space<vmem>>, vector<1x40xf32>
    %18 = vector.broadcast %17 : vector<1x40xf32> to vector<5x40xf32>
    %19 = arith.addf %16, %18 : vector<5x40xf32>
    %cst_17 = arith.constant 0.000000e+00 : f32
    %20 = vector.broadcast %cst_17 : f32 to vector<5x40xf32>
    %21 = arith.maximumf %19, %20 : vector<5x40xf32>
    %c0_18 = arith.constant 0 : index
    %c0_19 = arith.constant 0 : index
    %22 = vector.load %arg8[%c0_18, %c0_19] : memref<40x20xf32, #tpu.memory_space<vmem>>, vector<40x20xf32>
    %cst_20 = arith.constant dense<0.000000e+00> : vector<5x20xf32>
    %23 = tpu.matmul %21, %22, %cst_20 {dimension_numbers = #tpu.dot_dimension_numbers<[1], [0], [0], [1], [0, 0, 1, 1], [], []>} : vector<5x40xf32>, vector<40x20xf32>, vector<5x20xf32> -> vector<5x20xf32>
    %c0_21 = arith.constant 0 : index
    %c0_22 = arith.constant 0 : index
    %24 = vector.load %arg9[%c0_21, %c0_22] : memref<1x20xf32, #tpu.memory_space<vmem>>, vector<1x20xf32>
    %25 = vector.broadcast %24 : vector<1x20xf32> to vector<5x20xf32>
    %26 = arith.addf %23, %25 : vector<5x20xf32>
    %c0_23 = arith.constant 0 : index
    %c0_24 = arith.constant 0 : index
    %27 = vector.load %arg10[%c0_23, %c0_24] : memref<5x20xf32, #tpu.memory_space<vmem>>, vector<5x20xf32>
    tpu.vector_store %arg10[%c0_23, %c0_24], %26 {strides = array<i32>} : memref<5x20xf32, #tpu.memory_space<vmem>>, vector<5x20xf32>,
    return
  }
  func.func @transform_0(%arg0: i32) -> (i32, i32) {
    %c0_i32 = arith.constant 0 : i32
    %c0_i32_0 = arith.constant 0 : i32
    return %arg0, %c0_i32 : i32, i32
  }
  func.func @transform_1(%arg0: i32) -> (i32, i32) {
    %c0_i32 = arith.constant 0 : i32
    %c0_i32_0 = arith.constant 0 : i32
    %c0_i32_1 = arith.constant 0 : i32
    return %c0_i32, %c0_i32_0 : i32, i32
  }
  func.func @transform_2(%arg0: i32) -> (i32, i32) {
    %c0_i32 = arith.constant 0 : i32
    %c0_i32_0 = arith.constant 0 : i32
    %c0_i32_1 = arith.constant 0 : i32
    return %c0_i32, %c0_i32_0 : i32, i32
  }
  func.func @transform_3(%arg0: i32) -> (i32, i32) {
    %c0_i32 = arith.constant 0 : i32
    %c0_i32_0 = arith.constant 0 : i32
    %c0_i32_1 = arith.constant 0 : i32
    return %c0_i32, %c0_i32_0 : i32, i32
  }
  func.func @transform_4(%arg0: i32) -> (i32, i32) {
    %c0_i32 = arith.constant 0 : i32
    %c0_i32_0 = arith.constant 0 : i32
    %c0_i32_1 = arith.constant 0 : i32
    return %c0_i32, %c0_i32_0 : i32, i32
  }
  func.func @transform_5(%arg0: i32) -> (i32, i32) {
    %c0_i32 = arith.constant 0 : i32
    %c0_i32_0 = arith.constant 0 : i32
    %c0_i32_1 = arith.constant 0 : i32
    return %c0_i32, %c0_i32_0 : i32, i32
  }
  func.func @transform_6(%arg0: i32) -> (i32, i32) {
    %c0_i32 = arith.constant 0 : i32
    %c0_i32_0 = arith.constant 0 : i32
    %c0_i32_1 = arith.constant 0 : i32
    return %c0_i32, %c0_i32_0 : i32, i32
  }
  func.func @transform_7(%arg0: i32) -> (i32, i32) {
    %c0_i32 = arith.constant 0 : i32
    %c0_i32_0 = arith.constant 0 : i32
    %c0_i32_1 = arith.constant 0 : i32
    return %c0_i32, %c0_i32_0 : i32, i32
  }
  func.func @transform_8(%arg0: i32) -> (i32, i32) {
    %c0_i32 = arith.constant 0 : i32
    %c0_i32_0 = arith.constant 0 : i32
    %c0_i32_1 = arith.constant 0 : i32
    return %c0_i32, %c0_i32_0 : i32, i32
  }
  func.func @transform_9(%arg0: i32) -> (i32, i32) {
    %c0_i32 = arith.constant 0 : i32
    %c0_i32_0 = arith.constant 0 : i32
    return %arg0, %c0_i32 : i32, i32
  }
}

</mosaic_0001>

<llo_original>
// kernel: tpu_custom_call.1
$region0: #{tpu_custom_call.1}
  #allocation0 [shape = 'u32[]', space=smem, size = 0x4, offset = 0x4, fixed_abs, tag = 'smem constant byte address 0x4 - core index']
  #allocation1 [shape = 'u32[72,128]{1,0:T(1,128)}', space=vmem, size = 0x9000, scoped, tag = 'internal scratch']
  %s0 = inlined_call_operand.vmem [shape: f32[5,24], index: 0, kind: input, shape index: {}]
  %s1 = inlined_call_operand.vmem [shape: f32[24,50], index: 1, kind: input, shape index: {}]
  %s2 = inlined_call_operand.vmem [shape: f32[1,50], index: 2, kind: input, shape index: {}]
  %s3 = inlined_call_operand.vmem [shape: f32[50,50], index: 3, kind: input, shape index: {}]
  %s4 = inlined_call_operand.vmem [shape: f32[1,50], index: 4, kind: input, shape index: {}]
  %s5 = inlined_call_operand.vmem [shape: f32[50,40], index: 5, kind: input, shape index: {}]
  %s6 = inlined_call_operand.vmem [shape: f32[1,40], index: 6, kind: input, shape index: {}]
  %s7 = inlined_call_operand.vmem [shape: f32[40,20], index: 7, kind: input, shape index: {}]
  %s8 = inlined_call_operand.vmem [shape: f32[1,20], index: 8, kind: input, shape index: {}]
  %s9 = inlined_call_operand.hbm [shape: f32[5,20], index: 9, kind: output, shape index: {}]
  %s10 = sld [smem:[#allocation0]]
  $region46: #{tpu_custom_call.1} parent=0
    _
  %s12 = ssub.s32 1, %s10
  %s13 = scalar_select 0, %s12, %s10
  $region1: #{tpu_custom_call.1} parent=0
    #allocation2 [shape = 'u8[4096]{0}', space=vmem, size = 0x1000, scoped, tag = 'output window, operand 0, single buffered']
    #allocation3 [shape = 's32[1]{0}', space=sflag, size = 0x4, scoped, tag = 'scoped memory for tpu_custom_call.1']
    %14 = vsyncpa [#allocation3], 0
    // Predicated region
    $region2: #{tpu_custom_call.1} parent=1 // pred_check
      _
    $region3: #{tpu_custom_call.1} parent=1 // pred_check_branch
      %16 = sbr.rel (0) target = $region5
    $region4: #{tpu_custom_call.1} parent=1 // pred_region
      _
    $region5: #{tpu_custom_call.1} parent=1 // pred_fallthru
      _
    // Predicated region
    $region6: #{tpu_custom_call.1} parent=1 // pred_check
      _
    $region7: #{tpu_custom_call.1} parent=1 // pred_check_branch
      %18 = sbr.rel (0) target = $region9
    $region8: #{tpu_custom_call.1} parent=1 // pred_region
      _
    $region9: #{tpu_custom_call.1} parent=1 // pred_fallthru
      _
    // Predicated region
    $region10: #{tpu_custom_call.1} parent=1 // pred_check
      _
    $region11: #{tpu_custom_call.1} parent=1 // pred_check_branch
      %20 = sbr.rel (0) target = $region13
    $region12: #{tpu_custom_call.1} parent=1 // pred_region
      _
    $region13: #{tpu_custom_call.1} parent=1 // pred_fallthru
      _
    // Predicated region
    $region14: #{tpu_custom_call.1} parent=1 // pred_check
      _
    $region15: #{tpu_custom_call.1} parent=1 // pred_check_branch
      %22 = sbr.rel (0) target = $region17
    $region16: #{tpu_custom_call.1} parent=1 // pred_region
      _
    $region17: #{tpu_custom_call.1} parent=1 // pred_fallthru
      _
    // Predicated region
    $region18: #{tpu_custom_call.1} parent=1 // pred_check
      _
    $region19: #{tpu_custom_call.1} parent=1 // pred_check_branch
      %24 = sbr.rel (0) target = $region21
    $region20: #{tpu_custom_call.1} parent=1 // pred_region
      _
    $region21: #{tpu_custom_call.1} parent=1 // pred_fallthru
      _
    // Predicated region
    $region22: #{tpu_custom_call.1} parent=1 // pred_check
      _
    $region23: #{tpu_custom_call.1} parent=1 // pred_check_branch
      %26 = sbr.rel (0) target = $region25
    $region24: #{tpu_custom_call.1} parent=1 // pred_region
      _
    $region25: #{tpu_custom_call.1} parent=1 // pred_fallthru
      _
    // Predicated region
    $region26: #{tpu_custom_call.1} parent=1 // pred_check
      _
    $region27: #{tpu_custom_call.1} parent=1 // pred_check_branch
      %28 = sbr.rel (0) target = $region29
    $region28: #{tpu_custom_call.1} parent=1 // pred_region
      _
    $region29: #{tpu_custom_call.1} parent=1 // pred_fallthru
      _
    // Predicated region
    $region30: #{tpu_custom_call.1} parent=1 // pred_check
      _
    $region31: #{tpu_custom_call.1} parent=1 // pred_check_branch
      %30 = sbr.rel (0) target = $region33
    $region32: #{tpu_custom_call.1} parent=1 // pred_region
      _
    $region33: #{tpu_custom_call.1} parent=1 // pred_fallthru
      _
    // Predicated region
    $region34: #{tpu_custom_call.1} parent=1 // pred_check
      _
    $region35: #{tpu_custom_call.1} parent=1 // pred_check_branch
      %32 = sbr.rel (0) target = $region37
    $region36: #{tpu_custom_call.1} parent=1 // pred_region
      _
    $region37: #{tpu_custom_call.1} parent=1 // pred_fallthru
      _
    %v33 = vld [vmem:[%s0] sm:$0x1f]
    %v34 = vld [vmem:[%s1] sm:$0xff]
    %v35 = vld [vmem:[%s1 + $0x8] sm:$0xff]
    %v36 = vld [vmem:[%s1 + $0x10] sm:$0xff]
    %v37 = vld [vmem:[%s2] sm:$0x1]
    %v39 = vperm.slane %v37, 0
    %vm41 = vcmask 195584
    %v43 = vsel %vm41, %v33, 0
    %45 = vmatpush.msra.mxu0 0.0
    %46 = vmatpush.msra.mxu0 0.0
    %47 = vmatpush.msra.mxu0 0.0
    %48 = vmatpush.msra.mxu0 0.0
    %49 = vmatpush.msra.mxu0 0.0
    %50 = vmatpush.msra.mxu0 0.0
    %51 = vmatpush.msra.mxu0 0.0
    %52 = vmatpush.msra.mxu0 0.0
    %53 = vmatpush.msra.mxu0 0.0
    %54 = vmatpush.msra.mxu0 0.0
    %55 = vmatpush.msra.mxu0 0.0
    %56 = vmatpush.msra.mxu0 0.0
    %57 = vmatpush.msra.mxu0 0.0
    %58 = vmatpush.msra.mxu0 %v36
    %59 = vmatpush.msra.mxu0 %v35
    %60 = vmatpush.msra.mxu0 %v34
    %61 = vmatmul.f32.gmra.mxu0 %v43
    %v62 = vpop.f32.mrf.mxu0
    %v63 = vadd.f32 %v39, %v62
    %64 = vdwg.mxu0
    %v65 = vmax.f32 %v63, 0.0
    %v66 = vld [vmem:[%s3] sm:$0xff]
    %v67 = vld [vmem:[%s3 + $0x8] sm:$0xff]
    %v68 = vld [vmem:[%s3 + $0x10] sm:$0xff]
    %v69 = vld [vmem:[%s3 + $0x18] sm:$0xff]
    %v70 = vld [vmem:[%s3 + $0x20] sm:$0xff]
    %v71 = vld [vmem:[%s3 + $0x28] sm:$0xff]
    %v72 = vld [vmem:[%s3 + $0x30] sm:$0x3]
    %v73 = vld [vmem:[%s4] sm:$0x1]
    %v75 = vperm.slane %v73, 0
    %vm77 = vcmask 408576
    %v79 = vsel %vm77, %v65, 0
    %vm81 = vcmask 1041408
    %v83 = vsel %vm81, %v72, 0
    %85 = vmatpush.msra.mxu0 0.0
    %86 = vmatpush.msra.mxu0 0.0
    %87 = vmatpush.msra.mxu0 0.0
    %88 = vmatpush.msra.mxu0 0.0
    %89 = vmatpush.msra.mxu0 0.0
    %90 = vmatpush.msra.mxu0 0.0
    %91 = vmatpush.msra.mxu0 0.0
    %92 = vmatpush.msra.mxu0 0.0
    %93 = vmatpush.msra.mxu0 0.0
    %94 = vmatpush.msra.mxu0 %v83
    %95 = vmatpush.msra.mxu0 %v71
    %96 = vmatpush.msra.mxu0 %v70
    %97 = vmatpush.msra.mxu0 %v69
    %98 = vmatpush.msra.mxu0 %v68
    %99 = vmatpush.msra.mxu0 %v67
    %100 = vmatpush.msra.mxu0 %v66
    %101 = vmatmul.f32.gmra.mxu0 %v79
    %v102 = vpop.f32.mrf.mxu0
    %v103 = vadd.f32 %v75, %v102
    %104 = vdwg.mxu0
    %v105 = vmax.f32 %v103, 0.0
    %v106 = vld [vmem:[%s5] sm:$0xff]
    %v107 = vld [vmem:[%s5 + $0x8] sm:$0xff]
    %v108 = vld [vmem:[%s5 + $0x10] sm:$0xff]
    %v109 = vld [vmem:[%s5 + $0x18] sm:$0xff]
    %v110 = vld [vmem:[%s5 + $0x20] sm:$0xff]
    %v111 = vld [vmem:[%s5 + $0x28] sm:$0xff]
    %v112 = vld [vmem:[%s5 + $0x30] sm:$0x3]
    %v113 = vld [vmem:[%s6] sm:$0x1]
    %v115 = vperm.slane %v113, 0
    %v118 = vsel %vm77, %v105, 0
    %v121 = vsel %vm81, %v112, 0
    %123 = vmatpush.msra.mxu0 0.0
    %124 = vmatpush.msra.mxu0 0.0
    %125 = vmatpush.msra.mxu0 0.0
    %126 = vmatpush.msra.mxu0 0.0
    %127 = vmatpush.msra.mxu0 0.0
    %128 = vmatpush.msra.mxu0 0.0
    %129 = vmatpush.msra.mxu0 0.0
    %130 = vmatpush.msra.mxu0 0.0
    %131 = vmatpush.msra.mxu0 0.0
    %132 = vmatpush.msra.mxu0 %v121
    %133 = vmatpush.msra.mxu0 %v111
    %134 = vmatpush.msra.mxu0 %v110
    %135 = vmatpush.msra.mxu0 %v109
    %136 = vmatpush.msra.mxu0 %v108
    %137 = vmatpush.msra.mxu0 %v107
    %138 = vmatpush.msra.mxu0 %v106
    %139 = vmatmul.f32.gmra.mxu0 %v118
    %v140 = vpop.f32.mrf.mxu0
    %v141 = vadd.f32 %v115, %v140
    %142 = vdwg.mxu0
    %v143 = vmax.f32 %v141, 0.0
    %v144 = vld [vmem:[%s7] sm:$0xff]
    %v145 = vld [vmem:[%s7 + $0x8] sm:$0xff]
    %v146 = vld [vmem:[%s7 + $0x10] sm:$0xff]
    %v147 = vld [vmem:[%s7 + $0x18] sm:$0xff]
    %v148 = vld [vmem:[%s7 + $0x20] sm:$0xff]
    %v149 = vld [vmem:[%s8] sm:$0x1]
    %v151 = vperm.slane %v149, 0
    %vm153 = vcmask 326656
    %v155 = vsel %vm153, %v143, 0
    %157 = vmatpush.msra.mxu0 0.0
    %158 = vmatpush.msra.mxu0 0.0
    %159 = vmatpush.msra.mxu0 0.0
    %160 = vmatpush.msra.mxu0 0.0
    %161 = vmatpush.msra.mxu0 0.0
    %162 = vmatpush.msra.mxu0 0.0
    %163 = vmatpush.msra.mxu0 0.0
    %164 = vmatpush.msra.mxu0 0.0
    %165 = vmatpush.msra.mxu0 0.0
    %166 = vmatpush.msra.mxu0 0.0
    %167 = vmatpush.msra.mxu0 0.0
    %168 = vmatpush.msra.mxu0 %v148
    %169 = vmatpush.msra.mxu0 %v147
    %170 = vmatpush.msra.mxu0 %v146
    %171 = vmatpush.msra.mxu0 %v145
    %172 = vmatpush.msra.mxu0 %v144
    %173 = vmatmul.f32.gmra.mxu0 %v155
    %v174 = vpop.f32.mrf.mxu0
    %v175 = vadd.f32 %v151, %v174
    %176 = vdwg.mxu0
    %vm177 = vcmask 159744
    %178 = vst.msk [vmem:[#allocation2] sm:$0x1f] %vm177, %v175
    // Predicated region
    $region38: #{tpu_custom_call.1} parent=1 // pred_check
      _
    $region39: #{tpu_custom_call.1} parent=1 // pred_check_branch
      %180 = sbr.rel (0) target = $region41
    $region40: #{tpu_custom_call.1} parent=1 // pred_region
      %182 = vsyncadd [#allocation3], 0
      %s184 = sshll.u32 [#allocation2], 4
      %s185 = int_to_ptr.vmem [resolvable:$true] %s184
      %s186 = sshll.u32 %s9, 4
      %s187 = int_to_ptr.hbm [resolvable:$true] %s186
      %189 = dma.vmem_to_hbm [thread:$0]  %s185, 128, %s187, [#allocation3]
    $region41: #{tpu_custom_call.1} parent=1 // pred_fallthru
      _
    // Predicated region
    $region42: #{tpu_custom_call.1} parent=1 // pred_check
      _
    $region43: #{tpu_custom_call.1} parent=1 // pred_check_branch
      %191 = sbr.rel (0) target = $region45
    $region44: #{tpu_custom_call.1} parent=1 // pred_region
      %193 = dma.done [#allocation3], 128
    $region45: #{tpu_custom_call.1} parent=1 // pred_fallthru
      _
    %194 = vsyncpa [#allocation3], 1

</llo_original>
